<compile_context>
chip_gen: v7x
topology: tpu7x:2x2x1
jax: 0.10.0
libtpu: 0.0.40
codegen_flags: <defaults>
</compile_context>

<pallas_src>
import functools

import jax
import jax.numpy as jnp
from jax.experimental import pallas as pl
from jax.experimental.pallas import tpu as pltpu


def _round_up(n: int, m: int) -> int:
    return ((n + m - 1) // m) * m


def _mlp_kernel(x_ref, w1_ref, b1_ref, w2_ref, b2_ref, w3_ref, b3_ref, o_ref):
    bf16 = jnp.bfloat16
    x = x_ref[...].astype(bf16)  # in-kernel cast, hidden under MXU/DMA
    # fc1 + ReLU (bf16 MXU operands, f32 accumulate, f32 epilogue)
    h1 = jnp.dot(x, w1_ref[...], preferred_element_type=jnp.float32)
    h1 = jnp.maximum(h1 + b1_ref[...], 0.0)
    # fc2 + ReLU
    h2 = jnp.dot(h1.astype(bf16), w2_ref[...], preferred_element_type=jnp.float32)
    h2 = jnp.maximum(h2 + b2_ref[...], 0.0)
    # fc3 (no activation): compute lane-dense (TB, AP), store only the real A lanes.
    out = jnp.dot(h2.astype(bf16), w3_ref[...], preferred_element_type=jnp.float32)
    a = o_ref.shape[1]
    o_ref[...] = (out[:, :a] + b3_ref[...]).astype(o_ref.dtype)


def prepare_params(params):
    """One-time pad + bf16 cast of the weights (hoisted out of the per-call path).

    params: dict with w1 [S,H], b1 [1,H], w2 [H,H], b2 [1,H], w3 [H,A], b3 [1,A] (float32).
    Zero-padding is numerically benign: padded hidden lanes get bias 0 -> ReLU 0 ->
    contribute 0 downstream; padded action lanes are never stored.
    """
    w1, b1, w2, b2, w3, b3 = (params["w1"], params["b1"], params["w2"],
                              params["b2"], params["w3"], params["b3"])
    S, H = w1.shape
    A = w3.shape[1]
    HP = _round_up(H, 128)   # lane-dense hidden dim
    AP = _round_up(A, 128)   # lane-dense final matmul width (sliced to A before store)
    bf16, f32 = jnp.bfloat16, jnp.float32
    return {
        "w1": jnp.zeros((S, HP), bf16).at[:, :H].set(w1.astype(bf16)),
        "b1": jnp.zeros((1, HP), f32).at[:, :H].set(b1.astype(f32)),
        "w2": jnp.zeros((HP, HP), bf16).at[:H, :H].set(w2.astype(bf16)),
        "b2": jnp.zeros((1, HP), f32).at[:, :H].set(b2.astype(f32)),
        "w3": jnp.zeros((HP, AP), bf16).at[:H, :A].set(w3.astype(bf16)),
        "b3": b3.astype(f32).reshape(1, A),   # unpadded: added after the lane slice
    }


@functools.partial(jax.jit, static_argnames=("block_b",))
def dqn_network_forward(x, prepared, *, block_b: int = 256):
    """Pallas TPU forward for the DQN MLP.

    x: [B, state_size] float32
    prepared: output of prepare_params()
    returns: [B, action_size] float32
    """
    B, S = x.shape
    HP = prepared["w1"].shape[1]
    AP = prepared["w3"].shape[1]
    A = prepared["b3"].shape[1]

    # Batch tile: multiple of 8 sublanes; capped at ceil(B/2) (rounded to 8) so the
    # 1-D "parallel" grid has >=2 steps and both v7x TensorCores get work.
    TB = min(block_b, max(8, _round_up(pl.cdiv(B, 2), 8)))
    grid = (pl.cdiv(B, TB),)

    # Weights/biases: same block every grid step -> stay resident in VMEM.
    def resident(arr):
        return pl.BlockSpec(arr.shape, lambda i: (0, 0))

    w_bytes = sum(int(v.size) * v.dtype.itemsize for v in prepared.values())
    cost = pl.CostEstimate(
        flops=2 * B * (S * HP + HP * HP + HP * AP),
        transcendentals=0,
        bytes_accessed=int(x.size) * x.dtype.itemsize + w_bytes + B * A * 4,
    )

    out = pl.pallas_call(
        _mlp_kernel,
        out_shape=jax.ShapeDtypeStruct((B, A), jnp.float32),
        grid=grid,
        in_specs=[
            pl.BlockSpec((TB, S), lambda i: (i, 0)),   # x: streamed over batch
            resident(prepared["w1"]), resident(prepared["b1"]),
            resident(prepared["w2"]), resident(prepared["b2"]),
            resident(prepared["w3"]), resident(prepared["b3"]),
        ],
        out_specs=pl.BlockSpec((TB, A), lambda i: (i, 0)),   # unpadded output write
        compiler_params=pltpu.CompilerParams(
            dimension_semantics=("parallel",),               # megacore sharding on v7x
        ),
        cost_estimate=cost,
    )(x, prepared["w1"], prepared["b1"], prepared["w2"], prepared["b2"],
      prepared["w3"], prepared["b3"])
    return out


def init_params(key, state_size, action_size, hidden=64):
    """Deterministic init mimicking PyTorch's default Linear init (uniform +-1/sqrt(fan_in))."""
    keys = jax.random.split(key, 6)

    def lin(kw, kb, fan_in, fan_out):
        bound = 1.0 / jnp.sqrt(jnp.float32(fan_in))
        w = jax.random.uniform(kw, (fan_in, fan_out), jnp.float32, -bound, bound)
        b = jax.random.uniform(kb, (1, fan_out), jnp.float32, -bound, bound)
        return w, b

    w1, b1 = lin(keys[0], keys[1], state_size, hidden)
    w2, b2 = lin(keys[2], keys[3], hidden, hidden)
    w3, b3 = lin(keys[4], keys[5], hidden, action_size)
    return {"w1": w1, "b1": b1, "w2": w2, "b2": b2, "w3": w3, "b3": b3}


def reference_forward(x, p):
    h1 = jnp.maximum(x @ p["w1"] + p["b1"], 0.0)
    h2 = jnp.maximum(h1 @ p["w2"] + p["b2"], 0.0)
    return h2 @ p["w3"] + p["b3"]


if __name__ == "__main__":
    state_size = 32
    action_size = 8
    batch = 8

    key = jax.random.PRNGKey(0)
    kx, kp = jax.random.split(key)
    x = jax.random.normal(kx, (batch, state_size), dtype=jnp.float32)
    params = init_params(kp, state_size, action_size)

    prepared = prepare_params(params)          # one-time pad + cast (hoisted)
    out = dqn_network_forward(x, prepared)
    out = jax.block_until_ready(out)

    ref = reference_forward(x, params)
    assert out.shape == (batch, action_size)
    # bf16 MXU operands -> compare against f32 reference with a bf16-appropriate tolerance.
    # NOTE: bf16 weights can flip argmax on near-tied Q-values vs. the f32 PyTorch reference.
    assert jnp.allclose(out, ref, atol=5e-2, rtol=5e-2), "mismatch vs reference"

    print("KERNEL_OK")
</pallas_src>

<mosaic_0001>
module attributes {stable_mosaic.version = 11 : i64} {
  func.func @_mlp_kernel(%arg0: i32, %arg1: memref<8x32xf32, #tpu.memory_space<vmem>>, %arg2: memref<32x128xbf16, #tpu.memory_space<vmem>>, %arg3: memref<1x128xf32, #tpu.memory_space<vmem>>, %arg4: memref<128x128xbf16, #tpu.memory_space<vmem>>, %arg5: memref<1x128xf32, #tpu.memory_space<vmem>>, %arg6: memref<128x128xbf16, #tpu.memory_space<vmem>>, %arg7: memref<1x8xf32, #tpu.memory_space<vmem>>, %arg8: memref<8x8xf32, #tpu.memory_space<vmem>>) attributes {dimension_semantics = [#tpu.dimension_semantics<parallel>], iteration_bounds = array<i64: 1>, scalar_prefetch = 0 : i64, scratch_operands = 0 : i64, tpu.core_type = #tpu.core_type<tc>, window_params = [{transform_indices = @transform_0, window_bounds = array<i64: 8, 32>}, {pipeline_mode = #tpu.pipeline_mode<synchronous>, transform_indices = @transform_1, window_bounds = array<i64: 32, 128>}, {pipeline_mode = #tpu.pipeline_mode<synchronous>, transform_indices = @transform_2, window_bounds = array<i64: 1, 128>}, {pipeline_mode = #tpu.pipeline_mode<synchronous>, transform_indices = @transform_3, window_bounds = array<i64: 128, 128>}, {pipeline_mode = #tpu.pipeline_mode<synchronous>, transform_indices = @transform_4, window_bounds = array<i64: 1, 128>}, {pipeline_mode = #tpu.pipeline_mode<synchronous>, transform_indices = @transform_5, window_bounds = array<i64: 128, 128>}, {pipeline_mode = #tpu.pipeline_mode<synchronous>, transform_indices = @transform_6, window_bounds = array<i64: 1, 8>}, {transform_indices = @transform_7, window_bounds = array<i64: 8, 8>}]} {
    %c0 = arith.constant 0 : index
    %c0_0 = arith.constant 0 : index
    %0 = vector.load %arg1[%c0, %c0_0] : memref<8x32xf32, #tpu.memory_space<vmem>>, vector<8x32xf32>
    %1 = arith.truncf %0 : vector<8x32xf32> to vector<8x32xbf16>
    %c0_1 = arith.constant 0 : index
    %c0_2 = arith.constant 0 : index
    %2 = vector.load %arg2[%c0_1, %c0_2] : memref<32x128xbf16, #tpu.memory_space<vmem>>, vector<32x128xbf16>
    %cst = arith.constant dense<0.000000e+00> : vector<8x128xf32>
    %3 = tpu.matmul %1, %2, %cst {dimension_numbers = #tpu.dot_dimension_numbers<[1], [0], [0], [1], [0, 0, 1, 1], [], []>} : vector<8x32xbf16>, vector<32x128xbf16>, vector<8x128xf32> -> vector<8x128xf32>
    %c0_3 = arith.constant 0 : index
    %c0_4 = arith.constant 0 : index
    %4 = vector.load %arg3[%c0_3, %c0_4] : memref<1x128xf32, #tpu.memory_space<vmem>>, vector<1x128xf32>
    %5 = vector.broadcast %4 : vector<1x128xf32> to vector<8x128xf32>
    %6 = arith.addf %3, %5 : vector<8x128xf32>
    %cst_5 = arith.constant 0.000000e+00 : f32
    %7 = vector.broadcast %cst_5 : f32 to vector<8x128xf32>
    %8 = arith.maximumf %6, %7 : vector<8x128xf32>
    %9 = arith.truncf %8 : vector<8x128xf32> to vector<8x128xbf16>
    %c0_6 = arith.constant 0 : index
    %c0_7 = arith.constant 0 : index
    %10 = vector.load %arg4[%c0_6, %c0_7] : memref<128x128xbf16, #tpu.memory_space<vmem>>, vector<128x128xbf16>
    %cst_8 = arith.constant dense<0.000000e+00> : vector<8x128xf32>
    %11 = tpu.matmul %9, %10, %cst_8 {dimension_numbers = #tpu.dot_dimension_numbers<[1], [0], [0], [1], [0, 0, 1, 1], [], []>} : vector<8x128xbf16>, vector<128x128xbf16>, vector<8x128xf32> -> vector<8x128xf32>
    %c0_9 = arith.constant 0 : index
    %c0_10 = arith.constant 0 : index
    %12 = vector.load %arg5[%c0_9, %c0_10] : memref<1x128xf32, #tpu.memory_space<vmem>>, vector<1x128xf32>
    %13 = vector.broadcast %12 : vector<1x128xf32> to vector<8x128xf32>
    %14 = arith.addf %11, %13 : vector<8x128xf32>
    %cst_11 = arith.constant 0.000000e+00 : f32
    %15 = vector.broadcast %cst_11 : f32 to vector<8x128xf32>
    %16 = arith.maximumf %14, %15 : vector<8x128xf32>
    %17 = arith.truncf %16 : vector<8x128xf32> to vector<8x128xbf16>
    %c0_12 = arith.constant 0 : index
    %c0_13 = arith.constant 0 : index
    %18 = vector.load %arg6[%c0_12, %c0_13] : memref<128x128xbf16, #tpu.memory_space<vmem>>, vector<128x128xbf16>
    %cst_14 = arith.constant dense<0.000000e+00> : vector<8x128xf32>
    %19 = tpu.matmul %17, %18, %cst_14 {dimension_numbers = #tpu.dot_dimension_numbers<[1], [0], [0], [1], [0, 0, 1, 1], [], []>} : vector<8x128xbf16>, vector<128x128xbf16>, vector<8x128xf32> -> vector<8x128xf32>
    %20 = vector.extract_strided_slice %19 {offsets = [0, 0], sizes = [8, 8], strides = [1, 1]} : vector<8x128xf32> to vector<8x8xf32>
    %c0_15 = arith.constant 0 : index
    %c0_16 = arith.constant 0 : index
    %21 = vector.load %arg7[%c0_15, %c0_16] : memref<1x8xf32, #tpu.memory_space<vmem>>, vector<1x8xf32>
    %22 = vector.broadcast %21 : vector<1x8xf32> to vector<8x8xf32>
    %23 = arith.addf %20, %22 : vector<8x8xf32>
    %c0_17 = arith.constant 0 : index
    %c0_18 = arith.constant 0 : index
    %24 = vector.load %arg8[%c0_17, %c0_18] : memref<8x8xf32, #tpu.memory_space<vmem>>, vector<8x8xf32>
    tpu.vector_store %arg8[%c0_17, %c0_18], %23 {strides = array<i32>} : memref<8x8xf32, #tpu.memory_space<vmem>>, vector<8x8xf32>,
    return
  }
  func.func @transform_0(%arg0: i32) -> (i32, i32) {
    %c0_i32 = arith.constant 0 : i32
    %c0_i32_0 = arith.constant 0 : i32
    return %arg0, %c0_i32 : i32, i32
  }
  func.func @transform_1(%arg0: i32) -> (i32, i32) {
    %c0_i32 = arith.constant 0 : i32
    %c0_i32_0 = arith.constant 0 : i32
    %c0_i32_1 = arith.constant 0 : i32
    return %c0_i32, %c0_i32_0 : i32, i32
  }
  func.func @transform_2(%arg0: i32) -> (i32, i32) {
    %c0_i32 = arith.constant 0 : i32
    %c0_i32_0 = arith.constant 0 : i32
    %c0_i32_1 = arith.constant 0 : i32
    return %c0_i32, %c0_i32_0 : i32, i32
  }
  func.func @transform_3(%arg0: i32) -> (i32, i32) {
    %c0_i32 = arith.constant 0 : i32
    %c0_i32_0 = arith.constant 0 : i32
    %c0_i32_1 = arith.constant 0 : i32
    return %c0_i32, %c0_i32_0 : i32, i32
  }
  func.func @transform_4(%arg0: i32) -> (i32, i32) {
    %c0_i32 = arith.constant 0 : i32
    %c0_i32_0 = arith.constant 0 : i32
    %c0_i32_1 = arith.constant 0 : i32
    return %c0_i32, %c0_i32_0 : i32, i32
  }
  func.func @transform_5(%arg0: i32) -> (i32, i32) {
    %c0_i32 = arith.constant 0 : i32
    %c0_i32_0 = arith.constant 0 : i32
    %c0_i32_1 = arith.constant 0 : i32
    return %c0_i32, %c0_i32_0 : i32, i32
  }
  func.func @transform_6(%arg0: i32) -> (i32, i32) {
    %c0_i32 = arith.constant 0 : i32
    %c0_i32_0 = arith.constant 0 : i32
    %c0_i32_1 = arith.constant 0 : i32
    return %c0_i32, %c0_i32_0 : i32, i32
  }
  func.func @transform_7(%arg0: i32) -> (i32, i32) {
    %c0_i32 = arith.constant 0 : i32
    %c0_i32_0 = arith.constant 0 : i32
    return %arg0, %c0_i32 : i32, i32
  }
}

</mosaic_0001>

<llo_original>
// kernel: dqn_network_forward.1
$region0: #{dqn_network_forward.1}
  #allocation0 [shape = 'u32[]', space=smem, size = 0x4, offset = 0x4, fixed_abs, tag = 'smem constant byte address 0x4 - core index']
  #allocation1 [shape = 'u32[144,128]{1,0:T(1,128)}', space=vmem, size = 0x12000, scoped, tag = 'internal scratch']
  %s0 = inlined_call_operand.hbm [shape: f32[8,32], index: 0, kind: input, shape index: {}]
  %s1 = inlined_call_operand.hbm [shape: bf16[32,128], index: 1, kind: input, shape index: {}]
  %s2 = inlined_call_operand.vmem [shape: f32[1,128], index: 2, kind: input, shape index: {}]
  %s3 = inlined_call_operand.hbm [shape: bf16[128,128], index: 3, kind: input, shape index: {}]
  %s4 = inlined_call_operand.vmem [shape: f32[1,128], index: 4, kind: input, shape index: {}]
  %s5 = inlined_call_operand.hbm [shape: bf16[128,128], index: 5, kind: input, shape index: {}]
  %s6 = inlined_call_operand.vmem [shape: f32[1,8], index: 6, kind: input, shape index: {}]
  %s7 = inlined_call_operand.hbm [shape: f32[8,8], index: 7, kind: output, shape index: {}]
  %s8 = sld [smem:[#allocation0]]
  $region54: #{dqn_network_forward.1} parent=0
    _
  %s10 = ssub.s32 1, %s8
  %s11 = scalar_select 0, %s10, %s8
  $region1: #{dqn_network_forward.1} parent=0
    #allocation2 [shape = 'u8[4096]{0}', space=vmem, size = 0x1000, scoped, tag = 'input window, operand 0, single buffered']
    #allocation3 [shape = 's32[1]{0}', space=sflag, size = 0x4, scoped, tag = 'scoped memory for dqn_network_forward.1']
    #allocation4 [shape = 's32[1]{0}', space=sflag, size = 0x4, scoped, tag = 'scoped memory for dqn_network_forward.1']
    #allocation5 [shape = 'u8[8192]{0}', space=vmem, size = 0x2000, scoped, tag = 'input window, operand 1, single buffered']
    #allocation6 [shape = 's32[1]{0}', space=sflag, size = 0x4, scoped, tag = 'scoped memory for dqn_network_forward.1']
    #allocation7 [shape = 'u8[32768]{0}', space=vmem, size = 0x8000, scoped, tag = 'input window, operand 3, single buffered']
    #allocation8 [shape = 'u8[32768]{0}', space=vmem, size = 0x8000, scoped, tag = 'input window, operand 5, single buffered']
    #allocation9 [shape = 's32[1]{0}', space=sflag, size = 0x4, scoped, tag = 'scoped memory for dqn_network_forward.1']
    #allocation10 [shape = 'u8[4096]{0}', space=vmem, size = 0x1000, scoped, tag = 'output window, operand 0, single buffered']
    %12 = vsyncpa [#allocation3], 0
    %13 = vsyncpa [#allocation6], 0
    %14 = vsyncpa [#allocation9], 0
    %15 = vsyncpa [#allocation4], 0
    // Predicated region
    $region2: #{dqn_network_forward.1} parent=1 // pred_check
      _
    $region3: #{dqn_network_forward.1} parent=1 // pred_check_branch
      %17 = sbr.rel (0) target = $region5
    $region4: #{dqn_network_forward.1} parent=1 // pred_region
      %s19 = ssub.s32 128, 128
      %20 = vsyncadd [#allocation3], %s19
      %s22 = sshll.u32 [#allocation2], 4
      %s23 = int_to_ptr.vmem [resolvable:$true] %s22
      %25 = dma.hbm_to_vmem [thread:$0]  %s0, 128, %s23, [#allocation3]
    $region5: #{dqn_network_forward.1} parent=1 // pred_fallthru
      _
    // Predicated region
    $region6: #{dqn_network_forward.1} parent=1 // pred_check
      _
    $region7: #{dqn_network_forward.1} parent=1 // pred_check_branch
      %27 = sbr.rel (0) target = $region9
    $region8: #{dqn_network_forward.1} parent=1 // pred_region
      %s29 = ssub.s32 256, 256
      %30 = vsyncadd [#allocation6], %s29
      %s31 = sshll.u32 [#allocation5], 4
      %s32 = int_to_ptr.vmem [resolvable:$true] %s31
      %37 = dma.hbm_to_vmem [thread:$0]  %s1, 256, %s32, [#allocation6], 64, 64, 4
    $region9: #{dqn_network_forward.1} parent=1 // pred_fallthru
      _
    // Predicated region
    $region10: #{dqn_network_forward.1} parent=1 // pred_check
      _
    $region11: #{dqn_network_forward.1} parent=1 // pred_check_branch
      %39 = sbr.rel (0) target = $region13
    $region12: #{dqn_network_forward.1} parent=1 // pred_region
      _
    $region13: #{dqn_network_forward.1} parent=1 // pred_fallthru
      _
    // Predicated region
    $region14: #{dqn_network_forward.1} parent=1 // pred_check
      _
    $region15: #{dqn_network_forward.1} parent=1 // pred_check_branch
      %41 = sbr.rel (0) target = $region17
    $region16: #{dqn_network_forward.1} parent=1 // pred_region
      %s43 = ssub.s32 1024, 1024
      %44 = vsyncadd [#allocation6], %s43
      %s45 = sshll.u32 [#allocation7], 4
      %s46 = int_to_ptr.vmem [resolvable:$true] %s45
      %51 = dma.hbm_to_vmem [thread:$0]  %s3, 1024, %s46, [#allocation6], 64, 64, 4
    $region17: #{dqn_network_forward.1} parent=1 // pred_fallthru
      _
    // Predicated region
    $region18: #{dqn_network_forward.1} parent=1 // pred_check
      _
    $region19: #{dqn_network_forward.1} parent=1 // pred_check_branch
      %53 = sbr.rel (0) target = $region21
    $region20: #{dqn_network_forward.1} parent=1 // pred_region
      _
    $region21: #{dqn_network_forward.1} parent=1 // pred_fallthru
      _
    // Predicated region
    $region22: #{dqn_network_forward.1} parent=1 // pred_check
      _
    $region23: #{dqn_network_forward.1} parent=1 // pred_check_branch
      %55 = sbr.rel (0) target = $region25
    $region24: #{dqn_network_forward.1} parent=1 // pred_region
      %s57 = ssub.s32 1024, 1024
      %58 = vsyncadd [#allocation9], %s57
      %s59 = sshll.u32 [#allocation8], 4
      %s60 = int_to_ptr.vmem [resolvable:$true] %s59
      %65 = dma.hbm_to_vmem [thread:$0]  %s5, 1024, %s60, [#allocation9], 64, 64, 4
    $region25: #{dqn_network_forward.1} parent=1 // pred_fallthru
      _
    // Predicated region
    $region26: #{dqn_network_forward.1} parent=1 // pred_check
      _
    $region27: #{dqn_network_forward.1} parent=1 // pred_check_branch
      %67 = sbr.rel (0) target = $region29
    $region28: #{dqn_network_forward.1} parent=1 // pred_region
      _
    $region29: #{dqn_network_forward.1} parent=1 // pred_fallthru
      _
    // Predicated region
    $region30: #{dqn_network_forward.1} parent=1 // pred_check
      _
    $region31: #{dqn_network_forward.1} parent=1 // pred_check_branch
      %69 = sbr.rel (0) target = $region33
    $region32: #{dqn_network_forward.1} parent=1 // pred_region
      %70 = dma.done [#allocation3], 128
    $region33: #{dqn_network_forward.1} parent=1 // pred_fallthru
      _
    // Predicated region
    $region34: #{dqn_network_forward.1} parent=1 // pred_check
      _
    $region35: #{dqn_network_forward.1} parent=1 // pred_check_branch
      %72 = sbr.rel (0) target = $region37
    $region36: #{dqn_network_forward.1} parent=1 // pred_region
      %73 = dma.done [#allocation6], 256
    $region37: #{dqn_network_forward.1} parent=1 // pred_fallthru
      _
    // Predicated region
    $region38: #{dqn_network_forward.1} parent=1 // pred_check
      _
    $region39: #{dqn_network_forward.1} parent=1 // pred_check_branch
      %75 = sbr.rel (0) target = $region41
    $region40: #{dqn_network_forward.1} parent=1 // pred_region
      %76 = dma.done [#allocation6], 1024
    $region41: #{dqn_network_forward.1} parent=1 // pred_fallthru
      _
    // Predicated region
    $region42: #{dqn_network_forward.1} parent=1 // pred_check
      _
    $region43: #{dqn_network_forward.1} parent=1 // pred_check_branch
      %78 = sbr.rel (0) target = $region45
    $region44: #{dqn_network_forward.1} parent=1 // pred_region
      %79 = dma.done [#allocation9], 1024
    $region45: #{dqn_network_forward.1} parent=1 // pred_fallthru
      _
    %v81 = vld [vmem:[#allocation2] sm:$0xff]
    %v82 = vpack.c.bf16 %v81, %v81
    %v83 = vld [vmem:[#allocation5] sm:$0xf]
    %v84 = vld [vmem:[#allocation5 + $0x4] sm:$0xf]
    %v85 = vld [vmem:[#allocation5 + $0x8] sm:$0xf]
    %v86 = vld [vmem:[#allocation5 + $0xc] sm:$0xf]
    %v87 = vld [vmem:[%s2] sm:$0x1]
    %v89 = vlaneseq
    %v90 = vshrl.u32 %v89, 7
    %v91 = vsub.s32 0, %v90
    %v92 = vrot.slane %v87, %v91
    %v98 = vunpack.c.l.b16 %v83
    %v99 = vunpack.c.l.b16 %v84
    %v100 = vunpack.c.l.b16 %v85
    %v101 = vunpack.c.l.b16 %v86
    %v102 = vpack.c.b16 %v99, %v98
    %v103 = vpack.c.b16 %v101, %v100
    %vm106 = vcmask 261120
    %v108 = vsel %vm106, %v82, 0
    %110 = vmatprep.subr.bf16.mxu0 0
    %111 = vmatpush1.bf16.msra.mxu0 %v102
    %112 = vmatprep.subr.bf16.mxu0 0
    %113 = vmatpush1.bf16.msra.mxu0 %v103
    %114 = vmatprep.subr.bf16.mxu0 0
    %115 = vmatpush1.bf16.msra.mxu0 0
    %116 = vmatprep.subr.bf16.mxu0 0
    %117 = vmatpush1.bf16.msra.mxu0 0
    %118 = vmatprep.subr.bf16.mxu0 0
    %119 = vmatpush1.bf16.msra.mxu0 0
    %120 = vmatprep.subr.bf16.mxu0 0
    %121 = vmatpush1.bf16.msra.mxu0 0
    %122 = vmatprep.subr.bf16.mxu0 0
    %123 = vmatpush1.bf16.msra.mxu0 0
    %124 = vmatprep.subr.bf16.mxu0 0
    %125 = vmatpush1.bf16.msra.mxu0 0
    %126 = vmatprep.subr.bf16.mxu0 0
    %127 = vmatpush1.bf16.msra.mxu0 0
    %128 = vmatprep.subr.bf16.mxu0 0
    %129 = vmatpush1.bf16.msra.mxu0 0
    %130 = vmatprep.subr.bf16.mxu0 0
    %131 = vmatpush1.bf16.msra.mxu0 0
    %132 = vmatprep.subr.bf16.mxu0 0
    %133 = vmatpush1.bf16.msra.mxu0 0
    %134 = vmatprep.subr.bf16.mxu0 0
    %135 = vmatpush1.bf16.msra.mxu0 0
    %136 = vmatprep.subr.bf16.mxu0 0
    %137 = vmatpush1.bf16.msra.mxu0 0
    %138 = vmatprep.subr.bf16.mxu0 0
    %139 = vmatpush1.bf16.msra.mxu0 0
    %140 = vmatprep.subr.bf16.mxu0 0
    %141 = vmatpush1.bf16.msra.mxu0 0
    %142 = vmatprep.mubr.bf16.mxu0 0
    %143 = vmatmul.mubr.bf16.gmra.mrb[0].mxu0 %v108
    %v144 = vpop.f32.mrb[0].mxu0
    %v145 = vadd.f32 %v92, %v144
    %v146 = vpop.f32.mrb[0].mxu0
    %v147 = vpop.f32.mrb[0].mxu0
    %v148 = vpop.f32.mrb[0].mxu0
    %149 = vdwg.mxu0
    %v150 = vmax.f32 %v145, 0.0
    %v151 = vpack.c.bf16 %v150, %v150
    %v152 = vld [vmem:[#allocation7] sm:$0xf]
    %v153 = vld [vmem:[#allocation7 + $0x4] sm:$0xf]
    %v154 = vld [vmem:[#allocation7 + $0x8] sm:$0xf]
    %v155 = vld [vmem:[#allocation7 + $0xc] sm:$0xf]
    %v156 = vld [vmem:[#allocation7 + $0x10] sm:$0xf]
    %v157 = vld [vmem:[#allocation7 + $0x14] sm:$0xf]
    %v158 = vld [vmem:[#allocation7 + $0x18] sm:$0xf]
    %v159 = vld [vmem:[#allocation7 + $0x1c] sm:$0xf]
    %v160 = vld [vmem:[#allocation7 + $0x20] sm:$0xf]
    %v161 = vld [vmem:[#allocation7 + $0x24] sm:$0xf]
    %v162 = vld [vmem:[#allocation7 + $0x28] sm:$0xf]
    %v163 = vld [vmem:[#allocation7 + $0x2c] sm:$0xf]
    %v164 = vld [vmem:[#allocation7 + $0x30] sm:$0xf]
    %v165 = vld [vmem:[#allocation7 + $0x34] sm:$0xf]
    %v166 = vld [vmem:[#allocation7 + $0x38] sm:$0xf]
    %v167 = vld [vmem:[#allocation7 + $0x3c] sm:$0xf]
    %v168 = vld [vmem:[%s4] sm:$0x1]
    %v170 = vlaneseq
    %v171 = vshrl.u32 %v170, 7
    %v172 = vsub.s32 0, %v171
    %v173 = vrot.slane %v168, %v172
    %v191 = vunpack.c.l.b16 %v152
    %v192 = vunpack.c.l.b16 %v153
    %v193 = vunpack.c.l.b16 %v154
    %v194 = vunpack.c.l.b16 %v155
    %v195 = vunpack.c.l.b16 %v156
    %v196 = vunpack.c.l.b16 %v157
    %v197 = vunpack.c.l.b16 %v158
    %v198 = vunpack.c.l.b16 %v159
    %v199 = vunpack.c.l.b16 %v160
    %v200 = vunpack.c.l.b16 %v161
    %v201 = vunpack.c.l.b16 %v162
    %v202 = vunpack.c.l.b16 %v163
    %v203 = vunpack.c.l.b16 %v164
    %v204 = vunpack.c.l.b16 %v165
    %v205 = vunpack.c.l.b16 %v166
    %v206 = vunpack.c.l.b16 %v167
    %v207 = vpack.c.b16 %v192, %v191
    %v208 = vpack.c.b16 %v194, %v193
    %v209 = vpack.c.b16 %v196, %v195
    %v210 = vpack.c.b16 %v198, %v197
    %v211 = vpack.c.b16 %v200, %v199
    %v212 = vpack.c.b16 %v202, %v201
    %v213 = vpack.c.b16 %v204, %v203
    %v214 = vpack.c.b16 %v206, %v205
    %223 = vmatprep.subr.bf16.mxu0 0
    %224 = vmatpush1.bf16.msra.mxu0 %v207
    %225 = vmatprep.subr.bf16.mxu0 0
    %226 = vmatpush1.bf16.msra.mxu0 %v208
    %227 = vmatprep.subr.bf16.mxu0 0
    %228 = vmatpush1.bf16.msra.mxu0 %v209
    %229 = vmatprep.subr.bf16.mxu0 0
    %230 = vmatpush1.bf16.msra.mxu0 %v210
    %231 = vmatprep.subr.bf16.mxu0 0
    %232 = vmatpush1.bf16.msra.mxu0 %v211
    %233 = vmatprep.subr.bf16.mxu0 0
    %234 = vmatpush1.bf16.msra.mxu0 %v212
    %235 = vmatprep.subr.bf16.mxu0 0
    %236 = vmatpush1.bf16.msra.mxu0 %v213
    %237 = vmatprep.subr.bf16.mxu0 0
    %238 = vmatpush1.bf16.msra.mxu0 %v214
    %239 = vmatprep.subr.bf16.mxu0 0
    %240 = vmatpush1.bf16.msra.mxu0 0
    %241 = vmatprep.subr.bf16.mxu0 0
    %242 = vmatpush1.bf16.msra.mxu0 0
    %243 = vmatprep.subr.bf16.mxu0 0
    %244 = vmatpush1.bf16.msra.mxu0 0
    %245 = vmatprep.subr.bf16.mxu0 0
    %246 = vmatpush1.bf16.msra.mxu0 0
    %247 = vmatprep.subr.bf16.mxu0 0
    %248 = vmatpush1.bf16.msra.mxu0 0
    %249 = vmatprep.subr.bf16.mxu0 0
    %250 = vmatpush1.bf16.msra.mxu0 0
    %251 = vmatprep.subr.bf16.mxu0 0
    %252 = vmatpush1.bf16.msra.mxu0 0
    %253 = vmatprep.subr.bf16.mxu0 0
    %254 = vmatpush1.bf16.msra.mxu0 0
    %255 = vmatprep.mubr.bf16.mxu0 0
    %256 = vmatmul.mubr.bf16.gmra.mrb[0].mxu0 %v151
    %v257 = vpop.f32.mrb[0].mxu0
    %v258 = vadd.f32 %v173, %v257
    %v259 = vpop.f32.mrb[0].mxu0
    %v260 = vpop.f32.mrb[0].mxu0
    %v261 = vpop.f32.mrb[0].mxu0
    %262 = vdwg.mxu0
    %v263 = vmax.f32 %v258, 0.0
    %v264 = vpack.c.bf16 %v263, %v263
    %v265 = vld [vmem:[#allocation8] sm:$0xf]
    %v266 = vld [vmem:[#allocation8 + $0x4] sm:$0xf]
    %v267 = vld [vmem:[#allocation8 + $0x8] sm:$0xf]
    %v268 = vld [vmem:[#allocation8 + $0xc] sm:$0xf]
    %v269 = vld [vmem:[#allocation8 + $0x10] sm:$0xf]
    %v270 = vld [vmem:[#allocation8 + $0x14] sm:$0xf]
    %v271 = vld [vmem:[#allocation8 + $0x18] sm:$0xf]
    %v272 = vld [vmem:[#allocation8 + $0x1c] sm:$0xf]
    %v273 = vld [vmem:[#allocation8 + $0x20] sm:$0xf]
    %v274 = vld [vmem:[#allocation8 + $0x24] sm:$0xf]
    %v275 = vld [vmem:[#allocation8 + $0x28] sm:$0xf]
    %v276 = vld [vmem:[#allocation8 + $0x2c] sm:$0xf]
    %v277 = vld [vmem:[#allocation8 + $0x30] sm:$0xf]
    %v278 = vld [vmem:[#allocation8 + $0x34] sm:$0xf]
    %v279 = vld [vmem:[#allocation8 + $0x38] sm:$0xf]
    %v280 = vld [vmem:[#allocation8 + $0x3c] sm:$0xf]
    %v297 = vunpack.c.l.b16 %v265
    %v298 = vunpack.c.l.b16 %v266
    %v299 = vunpack.c.l.b16 %v267
    %v300 = vunpack.c.l.b16 %v268
    %v301 = vunpack.c.l.b16 %v269
    %v302 = vunpack.c.l.b16 %v270
    %v303 = vunpack.c.l.b16 %v271
    %v304 = vunpack.c.l.b16 %v272
    %v305 = vunpack.c.l.b16 %v273
    %v306 = vunpack.c.l.b16 %v274
    %v307 = vunpack.c.l.b16 %v275
    %v308 = vunpack.c.l.b16 %v276
    %v309 = vunpack.c.l.b16 %v277
    %v310 = vunpack.c.l.b16 %v278
    %v311 = vunpack.c.l.b16 %v279
    %v312 = vunpack.c.l.b16 %v280
    %v313 = vpack.c.b16 %v298, %v297
    %v314 = vpack.c.b16 %v300, %v299
    %v315 = vpack.c.b16 %v302, %v301
    %v316 = vpack.c.b16 %v304, %v303
    %v317 = vpack.c.b16 %v306, %v305
    %v318 = vpack.c.b16 %v308, %v307
    %v319 = vpack.c.b16 %v310, %v309
    %v320 = vpack.c.b16 %v312, %v311
    %329 = vmatprep.subr.bf16.mxu0 0
    %330 = vmatpush1.bf16.msra.mxu0 %v313
    %331 = vmatprep.subr.bf16.mxu0 0
    %332 = vmatpush1.bf16.msra.mxu0 %v314
    %333 = vmatprep.subr.bf16.mxu0 0
    %334 = vmatpush1.bf16.msra.mxu0 %v315
    %335 = vmatprep.subr.bf16.mxu0 0
    %336 = vmatpush1.bf16.msra.mxu0 %v316
    %337 = vmatprep.subr.bf16.mxu0 0
    %338 = vmatpush1.bf16.msra.mxu0 %v317
    %339 = vmatprep.subr.bf16.mxu0 0
    %340 = vmatpush1.bf16.msra.mxu0 %v318
    %341 = vmatprep.subr.bf16.mxu0 0
    %342 = vmatpush1.bf16.msra.mxu0 %v319
    %343 = vmatprep.subr.bf16.mxu0 0
    %344 = vmatpush1.bf16.msra.mxu0 %v320
    %345 = vmatprep.subr.bf16.mxu0 0
    %346 = vmatpush1.bf16.msra.mxu0 0
    %347 = vmatprep.subr.bf16.mxu0 0
    %348 = vmatpush1.bf16.msra.mxu0 0
    %349 = vmatprep.subr.bf16.mxu0 0
    %350 = vmatpush1.bf16.msra.mxu0 0
    %351 = vmatprep.subr.bf16.mxu0 0
    %352 = vmatpush1.bf16.msra.mxu0 0
    %353 = vmatprep.subr.bf16.mxu0 0
    %354 = vmatpush1.bf16.msra.mxu0 0
    %355 = vmatprep.subr.bf16.mxu0 0
    %356 = vmatpush1.bf16.msra.mxu0 0
    %357 = vmatprep.subr.bf16.mxu0 0
    %358 = vmatpush1.bf16.msra.mxu0 0
    %359 = vmatprep.subr.bf16.mxu0 0
    %360 = vmatpush1.bf16.msra.mxu0 0
    %361 = vmatprep.mubr.bf16.mxu0 0
    %362 = vmatmul.mubr.bf16.gmra.mrb[0].mxu0 %v264
    %v363 = vpop.f32.mrb[0].mxu0
    %v364 = vadd.f32 0.0, %v363
    %v365 = vpop.f32.mrb[0].mxu0
    %v366 = vpop.f32.mrb[0].mxu0
    %v367 = vpop.f32.mrb[0].mxu0
    %368 = vdwg.mxu0
    %v369 = vld [vmem:[%s6] sm:$0x1]
    %v371 = vlaneseq
    %v372 = vshrl.u32 %v371, 7
    %v373 = vsub.s32 0, %v372
    %v374 = vrot.slane %v369, %v373
    %v376 = vadd.f32 %v364, %v374
    %vm377 = vcmask 64512
    %378 = vst.msk [vmem:[#allocation10] sm:$0xff] %vm377, %v376
    // Predicated region
    $region46: #{dqn_network_forward.1} parent=1 // pred_check
      _
    $region47: #{dqn_network_forward.1} parent=1 // pred_check_branch
      %380 = sbr.rel (0) target = $region49
    $region48: #{dqn_network_forward.1} parent=1 // pred_region
      %s382 = ssub.s32 128, 128
      %383 = vsyncadd [#allocation4], %s382
      %s385 = sshll.u32 [#allocation10], 4
      %s386 = int_to_ptr.vmem [resolvable:$true] %s385
      %388 = dma.vmem_to_hbm [thread:$0]  %s386, 128, %s7, [#allocation4]
    $region49: #{dqn_network_forward.1} parent=1 // pred_fallthru
      _
    // Predicated region
    $region50: #{dqn_network_forward.1} parent=1 // pred_check
      _
    $region51: #{dqn_network_forward.1} parent=1 // pred_check_branch
      %390 = sbr.rel (0) target = $region53
    $region52: #{dqn_network_forward.1} parent=1 // pred_region
      %391 = dma.done [#allocation4], 128
    $region53: #{dqn_network_forward.1} parent=1 // pred_fallthru
      _
    %392 = vsyncpa [#allocation3], 1
    %393 = vsyncpa [#allocation6], 1
    %394 = vsyncpa [#allocation9], 1
    %395 = vsyncpa [#allocation4], 1

</llo_original>
